<compile_context>
chip_gen: v7x
topology: tpu7x:2x2x1
jax: 0.10.0
libtpu: 0.0.40
codegen_flags: <defaults>
</compile_context>

<pallas_src>
import functools

import jax
import jax.numpy as jnp
from jax import lax
from jax.experimental import pallas as pl
from jax.experimental.pallas import tpu as pltpu


def _ceil_div(a, b):
    return (a + b - 1) // b


def _round_up(x, m):
    return _ceil_div(x, m) * m


def _channel_attention_kernel(x_ref, w1_ref, w2_ref, o_ref, sum_acc, max_acc,
                              *, hw, hw_tile, chunk, has_tail, inv_hw):
    # x_ref  : (Bb, C, hw_tile) spatial tile of Bb batch elements (NCHW-native)
    # w1_ref : (Cr, C)  == fc1.weight.reshape(Cr, C)   (resident)
    # w2_ref : (C, Cr)  == fc2.weight.reshape(C, Cr)   (resident)
    # o_ref  : (Bb, C)  lane-dense output block (written on last k step only)
    # sum_acc/max_acc : (Bb, C, chunk) f32 lane-dense running partial reductions
    k = pl.program_id(1)

    @pl.when(k == 0)
    def _init():
        sum_acc[...] = jnp.zeros_like(sum_acc)
        max_acc[...] = jnp.full_like(max_acc, -jnp.inf)

    n_chunks = hw_tile // chunk
    if has_tail:
        lane = lax.broadcasted_iota(jnp.int32, sum_acc.shape, 2)

    # VPU-only per-step accumulation: elementwise add/max of `chunk`-lane
    # static slices into lane-dense accumulators.  The single cross-lane
    # reduce is deferred to the finalize step.
    for j in range(n_chunks):
        c = x_ref[:, :, j * chunk:(j + 1) * chunk].astype(jnp.float32)
        if has_tail:
            valid = lane < (hw - (k * hw_tile + j * chunk))
            c_sum = jnp.where(valid, c, 0.0)
            c_max = jnp.where(valid, c, -jnp.inf)
        else:
            c_sum = c
            c_max = c
        sum_acc[...] += c_sum
        max_acc[...] = jnp.maximum(max_acc[...], c_max)

    @pl.when(k == pl.num_programs(1) - 1)
    def _finalize():
        avg = jnp.sum(sum_acc[...], axis=-1) * inv_hw          # (Bb, C)
        mx = jnp.max(max_acc[...], axis=-1)                    # (Bb, C)
        pooled = jnp.concatenate([avg, mx], axis=0)            # (2*Bb, C)

        w1 = w1_ref[...].astype(jnp.float32)                   # (Cr, C)
        w2 = w2_ref[...].astype(jnp.float32)                   # (C, Cr)

        # fc1 + ReLU for both pooled branches at once (contract over C).
        h = lax.dot_general(pooled, w1, (((1,), (1,)), ((), ())),
                            preferred_element_type=jnp.float32)    # (2*Bb, Cr)
        h = jnp.maximum(h, 0.0)
        bb = avg.shape[0]
        # fc2 is linear & bias-free: fc2(a) + fc2(b) == fc2(a + b).
        h = h[:bb] + h[bb:]                                     # (Bb, Cr)
        out = lax.dot_general(h, w2, (((1,), (1,)), ((), ())),
                              preferred_element_type=jnp.float32)  # (Bb, C)
        o_ref[...] = jax.nn.sigmoid(out).astype(o_ref.dtype)


def _choose_tiling(B, C, HW, itemsize, vmem_budget_bytes=4 * 1024 * 1024):
    """Pick (hw_tile, num_k, has_tail, chunk, Bb).

    hw_tile is a 128-multiple (or the full HW when HW < 128), sized so the x
    block stays within the single-buffer budget (double-buffering doubles it),
    and balanced so the k steps are roughly equal.  Bb packs multiple batch
    elements per step when the per-element block (+ accumulators) is small.
    """
    if HW < 128:
        hw_tile, num_k = HW, 1
    else:
        hw_down = (HW // 128) * 128
        lanes_budget = max(128, (vmem_budget_bytes // (C * itemsize)) // 128 * 128)
        max_tile = min(hw_down, lanes_budget, 8192)   # cap unroll / vreg pressure
        num_k = _ceil_div(HW, max_tile)
        hw_tile = min(max_tile, _round_up(_ceil_div(HW, num_k), 128))
        num_k = _ceil_div(HW, hw_tile)
    has_tail = (num_k * hw_tile != HW)
    chunk = min(hw_tile, 128)

    # Batch packing: x block (single buffer) + both f32 accumulators per element.
    per_b_bytes = C * hw_tile * itemsize + 2 * C * chunk * 4
    max_bb = max(1, int(1.5 * vmem_budget_bytes) // max(per_b_bytes, 1))
    bb = 1
    for d in range(min(B, max_bb), 0, -1):
        if B % d == 0:
            bb = d
            break
    return hw_tile, num_k, has_tail, chunk, bb


def channel_attention(x_nchw, w1, w2):
    """x_nchw: (B, C, H, W)
       w1: fc1 conv weight (Cr, C, 1, 1)   (Cr = C // 16)
       w2: fc2 conv weight (C, Cr, 1, 1)
       returns: (B, C, 1, 1) sigmoid channel gate, matching PyTorch."""
    B, C, H, W = x_nchw.shape
    Cr = w1.shape[0]
    HW = H * W
    itemsize = jnp.dtype(x_nchw.dtype).itemsize

    # Free, copy-less layout plumbing: NCHW -> (B, C, HW); 1x1 conv weights -> 2D.
    x = x_nchw.reshape(B, C, HW)
    w1m = w1.reshape(Cr, C)
    w2m = w2.reshape(C, Cr)

    hw_tile, num_k, has_tail, chunk, bb = _choose_tiling(B, C, HW, itemsize)

    kernel = functools.partial(
        _channel_attention_kernel,
        hw=HW, hw_tile=hw_tile, chunk=chunk, has_tail=has_tail, inv_hw=1.0 / HW)

    out = pl.pallas_call(
        kernel,
        out_shape=jax.ShapeDtypeStruct((B, C), x_nchw.dtype),
        grid_spec=pltpu.PrefetchScalarGridSpec(
            num_scalar_prefetch=0,
            grid=(B // bb, num_k),
            in_specs=[
                pl.BlockSpec((bb, C, hw_tile), lambda b, k: (b, 0, k)),  # x tile
                pl.BlockSpec((Cr, C), lambda b, k: (0, 0)),              # fc1 (resident)
                pl.BlockSpec((C, Cr), lambda b, k: (0, 0)),              # fc2 (resident)
            ],
            out_specs=pl.BlockSpec((bb, C), lambda b, k: (b, 0)),        # lane-dense
            scratch_shapes=[
                pltpu.VMEM((bb, C, chunk), jnp.float32),   # running sum
                pltpu.VMEM((bb, C, chunk), jnp.float32),   # running max
            ],
        ),
        compiler_params=pltpu.CompilerParams(
            dimension_semantics=("parallel", "arbitrary"),
            vmem_limit_bytes=32 * 1024 * 1024),
    )(x, w1m, w2m)

    return out.reshape(B, C, 1, 1)


def _reference(x_nchw, w1, w2):
    # Pure-JAX reference of the PyTorch forward (for correctness check).
    B, C, H, W = x_nchw.shape
    Cr = w1.shape[0]
    avg = jnp.mean(x_nchw.astype(jnp.float32), axis=(2, 3))    # (B, C)
    mx = jnp.max(x_nchw.astype(jnp.float32), axis=(2, 3))      # (B, C)
    w1m = w1.reshape(Cr, C).astype(jnp.float32)
    w2m = w2.reshape(C, Cr).astype(jnp.float32)
    branch = lambda v: (jnp.maximum(v @ w1m.T, 0.0)) @ w2m.T   # (B, C)
    out = jax.nn.sigmoid(branch(avg) + branch(mx))
    return out.reshape(B, C, 1, 1).astype(x_nchw.dtype)


if __name__ == "__main__":
    key = jax.random.PRNGKey(0)
    k_x, k_w1, k_w2, k_x2 = jax.random.split(key, 4)

    # in_planes=32 -> hidden = 32 // 16 = 2
    B, C, H, W = 2, 32, 16, 16
    Cr = C // 16

    x = jax.random.normal(k_x, (B, C, H, W), dtype=jnp.float32)
    # Deterministic synthetic conv weights (kaiming-ish scale), nn.Conv2d shapes.
    w1 = jax.random.normal(k_w1, (Cr, C, 1, 1), dtype=jnp.float32) * (1.0 / jnp.sqrt(C))
    w2 = jax.random.normal(k_w2, (C, Cr, 1, 1), dtype=jnp.float32) * (1.0 / jnp.sqrt(Cr))

    out = jax.block_until_ready(channel_attention(x, w1, w2))
    ref = _reference(x, w1, w2)
    assert out.shape == (B, C, 1, 1), out.shape
    assert jnp.allclose(out, ref, atol=1e-5, rtol=1e-5), "mismatch vs reference (case 1)"

    # Ragged spatial size (HW = 144, not a multiple of 128): exercises the
    # tiled path with in-kernel tail masking and multi-step accumulation.
    x2 = jax.random.normal(k_x2, (1, C, 12, 12), dtype=jnp.float32)
    out2 = jax.block_until_ready(channel_attention(x2, w1, w2))
    ref2 = _reference(x2, w1, w2)
    assert out2.shape == (1, C, 1, 1), out2.shape
    assert jnp.allclose(out2, ref2, atol=1e-5, rtol=1e-5), "mismatch vs reference (case 2)"

    print("KERNEL_OK")
</pallas_src>

<mosaic_0001>
module attributes {stable_mosaic.version = 11 : i64} {
  func.func @_channel_attention_kernel(%arg0: i32, %arg1: i32, %arg2: memref<2x32x256xf32, #tpu.memory_space<vmem>>, %arg3: memref<2x32xf32, #tpu.memory_space<vmem>>, %arg4: memref<32x2xf32, #tpu.memory_space<vmem>>, %arg5: memref<2x32xf32, #tpu.memory_space<vmem>>, %arg6: memref<2x32x128xf32, #tpu.memory_space<vmem>>, %arg7: memref<2x32x128xf32, #tpu.memory_space<vmem>>) attributes {dimension_semantics = [#tpu.dimension_semantics<parallel>, #tpu.dimension_semantics<arbitrary>], iteration_bounds = array<i64: 1, 1>, scalar_prefetch = 0 : i64, scratch_operands = 2 : i64, tpu.core_type = #tpu.core_type<tc>, window_params = [{transform_indices = @transform_0, window_bounds = array<i64: 2, 32, 256>}, {pipeline_mode = #tpu.pipeline_mode<synchronous>, transform_indices = @transform_1, window_bounds = array<i64: 2, 32>}, {pipeline_mode = #tpu.pipeline_mode<synchronous>, transform_indices = @transform_2, window_bounds = array<i64: 32, 2>}, {transform_indices = @transform_3, window_bounds = array<i64: 2, 32>}]} {
    %c0_i32 = arith.constant 0 : i32
    %0 = arith.cmpi eq, %arg1, %c0_i32 : i32
    %1 = arith.extui %0 : i1 to i32
    %c0_i32_0 = arith.constant 0 : i32
    %2 = arith.cmpi ne, %1, %c0_i32_0 : i32
    scf.if %2 {
      %cst = arith.constant 0.000000e+00 : f32
      %20 = vector.broadcast %cst : f32 to vector<2x32x128xf32>
      %c0_31 = arith.constant 0 : index
      %c0_32 = arith.constant 0 : index
      %c0_33 = arith.constant 0 : index
      %21 = vector.load %arg6[%c0_31, %c0_32, %c0_33] : memref<2x32x128xf32, #tpu.memory_space<vmem>>, vector<2x32x128xf32>
      tpu.vector_store %arg6[%c0_31, %c0_32, %c0_33], %20 {strides = array<i32>} : memref<2x32x128xf32, #tpu.memory_space<vmem>>, vector<2x32x128xf32>,
      %cst_34 = arith.constant 0xFF800000 : f32
      %22 = vector.broadcast %cst_34 : f32 to vector<2x32x128xf32>
      %c0_35 = arith.constant 0 : index
      %c0_36 = arith.constant 0 : index
      %c0_37 = arith.constant 0 : index
      %23 = vector.load %arg7[%c0_35, %c0_36, %c0_37] : memref<2x32x128xf32, #tpu.memory_space<vmem>>, vector<2x32x128xf32>
      tpu.vector_store %arg7[%c0_35, %c0_36, %c0_37], %22 {strides = array<i32>} : memref<2x32x128xf32, #tpu.memory_space<vmem>>, vector<2x32x128xf32>,
    } else {
    }
    %c0 = arith.constant 0 : index
    %c0_1 = arith.constant 0 : index
    %c0_2 = arith.constant 0 : index
    %3 = vector.load %arg2[%c0, %c0_1, %c0_2] : memref<2x32x256xf32, #tpu.memory_space<vmem>>, vector<2x32x128xf32>
    %c0_3 = arith.constant 0 : index
    %c0_4 = arith.constant 0 : index
    %c0_5 = arith.constant 0 : index
    %4 = vector.load %arg6[%c0_3, %c0_4, %c0_5] : memref<2x32x128xf32, #tpu.memory_space<vmem>>, vector<2x32x128xf32>
    %5 = arith.addf %4, %3 : vector<2x32x128xf32>
    %c0_6 = arith.constant 0 : index
    %c0_7 = arith.constant 0 : index
    %c0_8 = arith.constant 0 : index
    %6 = vector.load %arg6[%c0_6, %c0_7, %c0_8] : memref<2x32x128xf32, #tpu.memory_space<vmem>>, vector<2x32x128xf32>
    tpu.vector_store %arg6[%c0_6, %c0_7, %c0_8], %5 {strides = array<i32>} : memref<2x32x128xf32, #tpu.memory_space<vmem>>, vector<2x32x128xf32>,
    %c0_9 = arith.constant 0 : index
    %c0_10 = arith.constant 0 : index
    %c0_11 = arith.constant 0 : index
    %7 = vector.load %arg7[%c0_9, %c0_10, %c0_11] : memref<2x32x128xf32, #tpu.memory_space<vmem>>, vector<2x32x128xf32>
    %8 = arith.maximumf %7, %3 : vector<2x32x128xf32>
    %c0_12 = arith.constant 0 : index
    %c0_13 = arith.constant 0 : index
    %c0_14 = arith.constant 0 : index
    %9 = vector.load %arg7[%c0_12, %c0_13, %c0_14] : memref<2x32x128xf32, #tpu.memory_space<vmem>>, vector<2x32x128xf32>
    tpu.vector_store %arg7[%c0_12, %c0_13, %c0_14], %8 {strides = array<i32>} : memref<2x32x128xf32, #tpu.memory_space<vmem>>, vector<2x32x128xf32>,
    %c0_15 = arith.constant 0 : index
    %c0_16 = arith.constant 0 : index
    %c128 = arith.constant 128 : index
    %10 = vector.load %arg2[%c0_15, %c0_16, %c128] : memref<2x32x256xf32, #tpu.memory_space<vmem>>, vector<2x32x128xf32>
    %c0_17 = arith.constant 0 : index
    %c0_18 = arith.constant 0 : index
    %c0_19 = arith.constant 0 : index
    %11 = vector.load %arg6[%c0_17, %c0_18, %c0_19] : memref<2x32x128xf32, #tpu.memory_space<vmem>>, vector<2x32x128xf32>
    %12 = arith.addf %11, %10 : vector<2x32x128xf32>
    %c0_20 = arith.constant 0 : index
    %c0_21 = arith.constant 0 : index
    %c0_22 = arith.constant 0 : index
    %13 = vector.load %arg6[%c0_20, %c0_21, %c0_22] : memref<2x32x128xf32, #tpu.memory_space<vmem>>, vector<2x32x128xf32>
    tpu.vector_store %arg6[%c0_20, %c0_21, %c0_22], %12 {strides = array<i32>} : memref<2x32x128xf32, #tpu.memory_space<vmem>>, vector<2x32x128xf32>,
    %c0_23 = arith.constant 0 : index
    %c0_24 = arith.constant 0 : index
    %c0_25 = arith.constant 0 : index
    %14 = vector.load %arg7[%c0_23, %c0_24, %c0_25] : memref<2x32x128xf32, #tpu.memory_space<vmem>>, vector<2x32x128xf32>
    %15 = arith.maximumf %14, %10 : vector<2x32x128xf32>
    %c0_26 = arith.constant 0 : index
    %c0_27 = arith.constant 0 : index
    %c0_28 = arith.constant 0 : index
    %16 = vector.load %arg7[%c0_26, %c0_27, %c0_28] : memref<2x32x128xf32, #tpu.memory_space<vmem>>, vector<2x32x128xf32>
    tpu.vector_store %arg7[%c0_26, %c0_27, %c0_28], %15 {strides = array<i32>} : memref<2x32x128xf32, #tpu.memory_space<vmem>>, vector<2x32x128xf32>,
    %c0_i32_29 = arith.constant 0 : i32
    %17 = arith.cmpi eq, %arg1, %c0_i32_29 : i32
    %18 = arith.extui %17 : i1 to i32
    %c0_i32_30 = arith.constant 0 : i32
    %19 = arith.cmpi ne, %18, %c0_i32_30 : i32
    scf.if %19 {
      %c0_31 = arith.constant 0 : index
      %c0_32 = arith.constant 0 : index
      %c0_33 = arith.constant 0 : index
      %20 = vector.load %arg6[%c0_31, %c0_32, %c0_33] : memref<2x32x128xf32, #tpu.memory_space<vmem>>, vector<2x32x128xf32>
      %cst = arith.constant dense<0.000000e+00> : vector<2x32xf32>
      %21 = vector.multi_reduction <add>, %20, %cst [2] : vector<2x32x128xf32> to vector<2x32xf32>
      %cst_34 = arith.constant 3.906250e-03 : f32
      %22 = vector.broadcast %cst_34 : f32 to vector<2x32xf32>
      %23 = arith.mulf %21, %22 : vector<2x32xf32>
      %c0_35 = arith.constant 0 : index
      %c0_36 = arith.constant 0 : index
      %c0_37 = arith.constant 0 : index
      %24 = vector.load %arg7[%c0_35, %c0_36, %c0_37] : memref<2x32x128xf32, #tpu.memory_space<vmem>>, vector<2x32x128xf32>
      %cst_38 = arith.constant dense<0xFF800000> : vector<2x32xf32>
      %25 = vector.multi_reduction <maximumf>, %24, %cst_38 [2] : vector<2x32x128xf32> to vector<2x32xf32>
      %26 = tpu.concatenate %23, %25 in 0 : vector<2x32xf32>, vector<2x32xf32> -> vector<4x32xf32>
      %c0_39 = arith.constant 0 : index
      %c0_40 = arith.constant 0 : index
      %27 = vector.load %arg3[%c0_39, %c0_40] : memref<2x32xf32, #tpu.memory_space<vmem>>, vector<2x32xf32>
      %c0_41 = arith.constant 0 : index
      %c0_42 = arith.constant 0 : index
      %28 = vector.load %arg4[%c0_41, %c0_42] : memref<32x2xf32, #tpu.memory_space<vmem>>, vector<32x2xf32>
      %cst_43 = arith.constant dense<0.000000e+00> : vector<4x2xf32>
      %29 = tpu.matmul %26, %27, %cst_43 {dimension_numbers = #tpu.dot_dimension_numbers<[1], [1], [0], [0], [0, 0, 1, 0], [], []>} : vector<4x32xf32>, vector<2x32xf32>, vector<4x2xf32> -> vector<4x2xf32>
      %cst_44 = arith.constant 0.000000e+00 : f32
      %30 = vector.broadcast %cst_44 : f32 to vector<4x2xf32>
      %31 = arith.maximumf %29, %30 : vector<4x2xf32>
      %32 = vector.extract_strided_slice %31 {offsets = [0, 0], sizes = [2, 2], strides = [1, 1]} : vector<4x2xf32> to vector<2x2xf32>
      %33 = vector.extract_strided_slice %31 {offsets = [2, 0], sizes = [2, 2], strides = [1, 1]} : vector<4x2xf32> to vector<2x2xf32>
      %34 = arith.addf %32, %33 : vector<2x2xf32>
      %cst_45 = arith.constant dense<0.000000e+00> : vector<2x32xf32>
      %35 = tpu.matmul %34, %28, %cst_45 {dimension_numbers = #tpu.dot_dimension_numbers<[1], [1], [0], [0], [0, 0, 1, 0], [], []>} : vector<2x2xf32>, vector<32x2xf32>, vector<2x32xf32> -> vector<2x32xf32>
      %36 = arith.negf %35 : vector<2x32xf32>
      %37 = math.exp %36 : vector<2x32xf32>
      %cst_46 = arith.constant 1.000000e+00 : f32
      %38 = vector.broadcast %cst_46 : f32 to vector<2x32xf32>
      %39 = arith.addf %38, %37 : vector<2x32xf32>
      %40 = arith.divf %38, %39 : vector<2x32xf32>
      %c0_47 = arith.constant 0 : index
      %c0_48 = arith.constant 0 : index
      %41 = vector.load %arg5[%c0_47, %c0_48] : memref<2x32xf32, #tpu.memory_space<vmem>>, vector<2x32xf32>
      tpu.vector_store %arg5[%c0_47, %c0_48], %40 {strides = array<i32>} : memref<2x32xf32, #tpu.memory_space<vmem>>, vector<2x32xf32>,
    } else {
    }
    return
  }
  func.func @transform_0(%arg0: i32, %arg1: i32) -> (i32, i32, i32) {
    %c0_i32 = arith.constant 0 : i32
    %c0_i32_0 = arith.constant 0 : i32
    return %arg0, %c0_i32, %arg1 : i32, i32, i32
  }
  func.func @transform_1(%arg0: i32, %arg1: i32) -> (i32, i32) {
    %c0_i32 = arith.constant 0 : i32
    %c0_i32_0 = arith.constant 0 : i32
    %c0_i32_1 = arith.constant 0 : i32
    return %c0_i32, %c0_i32_0 : i32, i32
  }
  func.func @transform_2(%arg0: i32, %arg1: i32) -> (i32, i32) {
    %c0_i32 = arith.constant 0 : i32
    %c0_i32_0 = arith.constant 0 : i32
    %c0_i32_1 = arith.constant 0 : i32
    return %c0_i32, %c0_i32_0 : i32, i32
  }
  func.func @transform_3(%arg0: i32, %arg1: i32) -> (i32, i32) {
    %c0_i32 = arith.constant 0 : i32
    %c0_i32_0 = arith.constant 0 : i32
    return %arg0, %c0_i32 : i32, i32
  }
}

</mosaic_0001>

<llo_original>
// kernel: tpu_custom_call.1
$region0: #{tpu_custom_call.1}
  #allocation0 [shape = 'u32[]', space=smem, size = 0x4, offset = 0x4, fixed_abs, tag = 'smem constant byte address 0x4 - core index']
  #allocation1 [shape = 'u32[144,128]{1,0:T(1,128)}', space=vmem, size = 0x12000, scoped, tag = 'internal scratch']
  #allocation2 [shape = 'f32[2,32,128]{2,1,0:T(8,128)}', space=vmem, size = 0x8000, scoped, tag = 'scratch operand']
  #allocation3 [shape = 'f32[2,32,128]{2,1,0:T(8,128)}', space=vmem, size = 0x8000, scoped, tag = 'scratch operand']
  %s0 = inlined_call_operand.hbm [shape: f32[2,32,256], index: 0, kind: input, shape index: {}]
  %s1 = inlined_call_operand.vmem [shape: f32[2,32], index: 1, kind: input, shape index: {}]
  %s2 = inlined_call_operand.vmem [shape: f32[32,2], index: 2, kind: input, shape index: {}]
  %s3 = inlined_call_operand.hbm [shape: f32[2,32], index: 3, kind: output, shape index: {}]
  %s4 = sld [smem:[#allocation0]]
  $region34: #{tpu_custom_call.1} parent=0
    _
  %s6 = ssub.s32 1, %s4
  %s7 = scalar_select 0, %s6, %s4
  $region1: #{tpu_custom_call.1} parent=0
    #allocation4 [shape = 'u8[65536]{0}', space=vmem, size = 0x10000, scoped, tag = 'input window, operand 0, single buffered']
    #allocation5 [shape = 's32[1]{0}', space=sflag, size = 0x4, scoped, tag = 'scoped memory for tpu_custom_call.1']
    #allocation6 [shape = 's32[1]{0}', space=sflag, size = 0x4, scoped, tag = 'scoped memory for tpu_custom_call.1']
    #allocation7 [shape = 'u8[1024]{0}', space=vmem, size = 0x400, scoped, tag = 'output window, operand 0, single buffered']
    %8 = vsyncpa [#allocation5], 0
    %9 = vsyncpa [#allocation6], 0
    // Predicated region
    $region2: #{tpu_custom_call.1} parent=1 // pred_check
      _
    $region3: #{tpu_custom_call.1} parent=1 // pred_check_branch
      %11 = sbr.rel (0) target = $region5
    $region4: #{tpu_custom_call.1} parent=1 // pred_region
      %s13 = ssub.s32 2048, 2048
      %14 = vsyncadd [#allocation5], %s13
      %s15 = sshll.u32 [#allocation4], 4
      %s16 = int_to_ptr.vmem [resolvable:$true] %s15
      %21 = dma.hbm_to_vmem [thread:$0]  %s0, 2048, %s16, [#allocation5], 256, 256, 16
    $region5: #{tpu_custom_call.1} parent=1 // pred_fallthru
      _
    // Predicated region
    $region6: #{tpu_custom_call.1} parent=1 // pred_check
      _
    $region7: #{tpu_custom_call.1} parent=1 // pred_check_branch
      %23 = sbr.rel (0) target = $region9
    $region8: #{tpu_custom_call.1} parent=1 // pred_region
      _
    $region9: #{tpu_custom_call.1} parent=1 // pred_fallthru
      _
    // Predicated region
    $region10: #{tpu_custom_call.1} parent=1 // pred_check
      _
    $region11: #{tpu_custom_call.1} parent=1 // pred_check_branch
      %25 = sbr.rel (0) target = $region13
    $region12: #{tpu_custom_call.1} parent=1 // pred_region
      _
    $region13: #{tpu_custom_call.1} parent=1 // pred_fallthru
      _
    // Predicated region
    $region14: #{tpu_custom_call.1} parent=1 // pred_check
      _
    $region15: #{tpu_custom_call.1} parent=1 // pred_check_branch
      %27 = sbr.rel (0) target = $region17
    $region16: #{tpu_custom_call.1} parent=1 // pred_region
      %28 = dma.done [#allocation5], 2048
    $region17: #{tpu_custom_call.1} parent=1 // pred_fallthru
      _
    %p29 = scmp.eq.s32.totalorder 0, 0
    // Predicated region
    $region18: #{tpu_custom_call.1} parent=1 // pred_check
      %p30 = pneg %p29
    $region19: #{tpu_custom_call.1} parent=1 // pred_check_branch
      %32 = sbr.rel (%p30) target = $region21
    $region20: #{tpu_custom_call.1} parent=1 // pred_region
      %33 = vst [vmem:[#allocation2] sm:$0xff] 0.0
      %34 = vst [vmem:[#allocation2 + $0x8] sm:$0xff] 0.0
      %35 = vst [vmem:[#allocation2 + $0x10] sm:$0xff] 0.0
      %36 = vst [vmem:[#allocation2 + $0x18] sm:$0xff] 0.0
      %37 = vst [vmem:[#allocation2 + $0x20] sm:$0xff] 0.0
      %38 = vst [vmem:[#allocation2 + $0x28] sm:$0xff] 0.0
      %39 = vst [vmem:[#allocation2 + $0x30] sm:$0xff] 0.0
      %40 = vst [vmem:[#allocation2 + $0x38] sm:$0xff] 0.0
      %41 = vst [vmem:[#allocation3] sm:$0xff] -inf
      %42 = vst [vmem:[#allocation3 + $0x8] sm:$0xff] -inf
      %43 = vst [vmem:[#allocation3 + $0x10] sm:$0xff] -inf
      %44 = vst [vmem:[#allocation3 + $0x18] sm:$0xff] -inf
      %45 = vst [vmem:[#allocation3 + $0x20] sm:$0xff] -inf
      %46 = vst [vmem:[#allocation3 + $0x28] sm:$0xff] -inf
      %47 = vst [vmem:[#allocation3 + $0x30] sm:$0xff] -inf
      %48 = vst [vmem:[#allocation3 + $0x38] sm:$0xff] -inf
    $region21: #{tpu_custom_call.1} parent=1 // pred_fallthru
      _
    %v49 = vld [vmem:[#allocation4] sm:$0xff]
    %v50 = vld [vmem:[#allocation4 + $0x10] sm:$0xff]
    %v51 = vld [vmem:[#allocation4 + $0x20] sm:$0xff]
    %v52 = vld [vmem:[#allocation4 + $0x30] sm:$0xff]
    %v53 = vld [vmem:[#allocation4 + $0x40] sm:$0xff]
    %v54 = vld [vmem:[#allocation4 + $0x50] sm:$0xff]
    %v55 = vld [vmem:[#allocation4 + $0x60] sm:$0xff]
    %v56 = vld [vmem:[#allocation4 + $0x70] sm:$0xff]
    %v57 = vld [vmem:[#allocation2] sm:$0xff]
    %v58 = vld [vmem:[#allocation2 + $0x8] sm:$0xff]
    %v59 = vld [vmem:[#allocation2 + $0x10] sm:$0xff]
    %v60 = vld [vmem:[#allocation2 + $0x18] sm:$0xff]
    %v61 = vld [vmem:[#allocation2 + $0x20] sm:$0xff]
    %v62 = vld [vmem:[#allocation2 + $0x28] sm:$0xff]
    %v63 = vld [vmem:[#allocation2 + $0x30] sm:$0xff]
    %v64 = vld [vmem:[#allocation2 + $0x38] sm:$0xff]
    %v65 = vadd.f32 %v57, %v49
    %v66 = vadd.f32 %v58, %v50
    %v67 = vadd.f32 %v59, %v51
    %v68 = vadd.f32 %v60, %v52
    %v69 = vadd.f32 %v61, %v53
    %v70 = vadd.f32 %v62, %v54
    %v71 = vadd.f32 %v63, %v55
    %v72 = vadd.f32 %v64, %v56
    %73 = vst [vmem:[#allocation2] sm:$0xff] %v65
    %74 = vst [vmem:[#allocation2 + $0x8] sm:$0xff] %v66
    %75 = vst [vmem:[#allocation2 + $0x10] sm:$0xff] %v67
    %76 = vst [vmem:[#allocation2 + $0x18] sm:$0xff] %v68
    %77 = vst [vmem:[#allocation2 + $0x20] sm:$0xff] %v69
    %78 = vst [vmem:[#allocation2 + $0x28] sm:$0xff] %v70
    %79 = vst [vmem:[#allocation2 + $0x30] sm:$0xff] %v71
    %80 = vst [vmem:[#allocation2 + $0x38] sm:$0xff] %v72
    %v81 = vld [vmem:[#allocation3] sm:$0xff]
    %v82 = vld [vmem:[#allocation3 + $0x8] sm:$0xff]
    %v83 = vld [vmem:[#allocation3 + $0x10] sm:$0xff]
    %v84 = vld [vmem:[#allocation3 + $0x18] sm:$0xff]
    %v85 = vld [vmem:[#allocation3 + $0x20] sm:$0xff]
    %v86 = vld [vmem:[#allocation3 + $0x28] sm:$0xff]
    %v87 = vld [vmem:[#allocation3 + $0x30] sm:$0xff]
    %v88 = vld [vmem:[#allocation3 + $0x38] sm:$0xff]
    %v89 = vmax.f32 %v81, %v49
    %v90 = vmax.f32 %v82, %v50
    %v91 = vmax.f32 %v83, %v51
    %v92 = vmax.f32 %v84, %v52
    %v93 = vmax.f32 %v85, %v53
    %v94 = vmax.f32 %v86, %v54
    %v95 = vmax.f32 %v87, %v55
    %v96 = vmax.f32 %v88, %v56
    %97 = vst [vmem:[#allocation3] sm:$0xff] %v89
    %98 = vst [vmem:[#allocation3 + $0x8] sm:$0xff] %v90
    %99 = vst [vmem:[#allocation3 + $0x10] sm:$0xff] %v91
    %100 = vst [vmem:[#allocation3 + $0x18] sm:$0xff] %v92
    %101 = vst [vmem:[#allocation3 + $0x20] sm:$0xff] %v93
    %102 = vst [vmem:[#allocation3 + $0x28] sm:$0xff] %v94
    %103 = vst [vmem:[#allocation3 + $0x30] sm:$0xff] %v95
    %104 = vst [vmem:[#allocation3 + $0x38] sm:$0xff] %v96
    %v105 = vld [vmem:[#allocation4 + $0x8] sm:$0xff]
    %v106 = vld [vmem:[#allocation4 + $0x18] sm:$0xff]
    %v107 = vld [vmem:[#allocation4 + $0x28] sm:$0xff]
    %v108 = vld [vmem:[#allocation4 + $0x38] sm:$0xff]
    %v109 = vld [vmem:[#allocation4 + $0x48] sm:$0xff]
    %v110 = vld [vmem:[#allocation4 + $0x58] sm:$0xff]
    %v111 = vld [vmem:[#allocation4 + $0x68] sm:$0xff]
    %v112 = vld [vmem:[#allocation4 + $0x78] sm:$0xff]
    %v113 = vld [vmem:[#allocation2] sm:$0xff]
    %v114 = vld [vmem:[#allocation2 + $0x8] sm:$0xff]
    %v115 = vld [vmem:[#allocation2 + $0x10] sm:$0xff]
    %v116 = vld [vmem:[#allocation2 + $0x18] sm:$0xff]
    %v117 = vld [vmem:[#allocation2 + $0x20] sm:$0xff]
    %v118 = vld [vmem:[#allocation2 + $0x28] sm:$0xff]
    %v119 = vld [vmem:[#allocation2 + $0x30] sm:$0xff]
    %v120 = vld [vmem:[#allocation2 + $0x38] sm:$0xff]
    %v121 = vadd.f32 %v113, %v105
    %v122 = vadd.f32 %v114, %v106
    %v123 = vadd.f32 %v115, %v107
    %v124 = vadd.f32 %v116, %v108
    %v125 = vadd.f32 %v117, %v109
    %v126 = vadd.f32 %v118, %v110
    %v127 = vadd.f32 %v119, %v111
    %v128 = vadd.f32 %v120, %v112
    %129 = vst [vmem:[#allocation2] sm:$0xff] %v121
    %130 = vst [vmem:[#allocation2 + $0x8] sm:$0xff] %v122
    %131 = vst [vmem:[#allocation2 + $0x10] sm:$0xff] %v123
    %132 = vst [vmem:[#allocation2 + $0x18] sm:$0xff] %v124
    %133 = vst [vmem:[#allocation2 + $0x20] sm:$0xff] %v125
    %134 = vst [vmem:[#allocation2 + $0x28] sm:$0xff] %v126
    %135 = vst [vmem:[#allocation2 + $0x30] sm:$0xff] %v127
    %136 = vst [vmem:[#allocation2 + $0x38] sm:$0xff] %v128
    %v137 = vld [vmem:[#allocation3] sm:$0xff]
    %v138 = vld [vmem:[#allocation3 + $0x8] sm:$0xff]
    %v139 = vld [vmem:[#allocation3 + $0x10] sm:$0xff]
    %v140 = vld [vmem:[#allocation3 + $0x18] sm:$0xff]
    %v141 = vld [vmem:[#allocation3 + $0x20] sm:$0xff]
    %v142 = vld [vmem:[#allocation3 + $0x28] sm:$0xff]
    %v143 = vld [vmem:[#allocation3 + $0x30] sm:$0xff]
    %v144 = vld [vmem:[#allocation3 + $0x38] sm:$0xff]
    %v145 = vmax.f32 %v137, %v105
    %v146 = vmax.f32 %v138, %v106
    %v147 = vmax.f32 %v139, %v107
    %v148 = vmax.f32 %v140, %v108
    %v149 = vmax.f32 %v141, %v109
    %v150 = vmax.f32 %v142, %v110
    %v151 = vmax.f32 %v143, %v111
    %v152 = vmax.f32 %v144, %v112
    %153 = vst [vmem:[#allocation3] sm:$0xff] %v145
    %154 = vst [vmem:[#allocation3 + $0x8] sm:$0xff] %v146
    %155 = vst [vmem:[#allocation3 + $0x10] sm:$0xff] %v147
    %156 = vst [vmem:[#allocation3 + $0x18] sm:$0xff] %v148
    %157 = vst [vmem:[#allocation3 + $0x20] sm:$0xff] %v149
    %158 = vst [vmem:[#allocation3 + $0x28] sm:$0xff] %v150
    %159 = vst [vmem:[#allocation3 + $0x30] sm:$0xff] %v151
    %160 = vst [vmem:[#allocation3 + $0x38] sm:$0xff] %v152
    // Predicated region
    $region22: #{tpu_custom_call.1} parent=1 // pred_check
      %p161 = pneg %p29
    $region23: #{tpu_custom_call.1} parent=1 // pred_check_branch
      %163 = sbr.rel (%p161) target = $region25
    $region24: #{tpu_custom_call.1} parent=1 // pred_region
      %v164 = vld [vmem:[#allocation2] sm:$0xff]
      %v165 = vld [vmem:[#allocation2 + $0x8] sm:$0xff]
      %v166 = vld [vmem:[#allocation2 + $0x10] sm:$0xff]
      %v167 = vld [vmem:[#allocation2 + $0x18] sm:$0xff]
      %v168 = vld [vmem:[#allocation2 + $0x20] sm:$0xff]
      %v169 = vld [vmem:[#allocation2 + $0x28] sm:$0xff]
      %v170 = vld [vmem:[#allocation2 + $0x30] sm:$0xff]
      %v171 = vld [vmem:[#allocation2 + $0x38] sm:$0xff]
      %172 = vadd.xlane.f32.xlu0 %v164
      %v173 = vpop.xlane.xlu0 %172
      %174 = vadd.xlane.f32.xlu0 %v165
      %v175 = vpop.xlane.xlu0 %174
      %176 = vadd.xlane.f32.xlu0 %v166
      %v177 = vpop.xlane.xlu0 %176
      %178 = vadd.xlane.f32.xlu0 %v167
      %v179 = vpop.xlane.xlu0 %178
      %180 = vadd.xlane.f32.xlu0 %v168
      %v181 = vpop.xlane.xlu0 %180
      %182 = vadd.xlane.f32.xlu0 %v169
      %v183 = vpop.xlane.xlu0 %182
      %184 = vadd.xlane.f32.xlu0 %v170
      %v185 = vpop.xlane.xlu0 %184
      %186 = vadd.xlane.f32.xlu0 %v171
      %v187 = vpop.xlane.xlu0 %186
      %v188 = vmul.f32 %v173, 0.00390625
      %v189 = vmul.f32 %v175, 0.00390625
      %v190 = vmul.f32 %v177, 0.00390625
      %v191 = vmul.f32 %v179, 0.00390625
      %v192 = vmul.f32 %v181, 0.00390625
      %v193 = vmul.f32 %v183, 0.00390625
      %v194 = vmul.f32 %v185, 0.00390625
      %v195 = vmul.f32 %v187, 0.00390625
      %v196 = vld [vmem:[#allocation3] sm:$0xff]
      %v197 = vld [vmem:[#allocation3 + $0x8] sm:$0xff]
      %v198 = vld [vmem:[#allocation3 + $0x10] sm:$0xff]
      %v199 = vld [vmem:[#allocation3 + $0x18] sm:$0xff]
      %v200 = vld [vmem:[#allocation3 + $0x20] sm:$0xff]
      %v201 = vld [vmem:[#allocation3 + $0x28] sm:$0xff]
      %v202 = vld [vmem:[#allocation3 + $0x30] sm:$0xff]
      %v203 = vld [vmem:[#allocation3 + $0x38] sm:$0xff]
      %204 = vmax.xlane.f32.xlu0 %v196
      %v205 = vpop.xlane.xlu0 %204
      %206 = vmax.xlane.f32.xlu0 %v197
      %v207 = vpop.xlane.xlu0 %206
      %208 = vmax.xlane.f32.xlu0 %v198
      %v209 = vpop.xlane.xlu0 %208
      %210 = vmax.xlane.f32.xlu0 %v199
      %v211 = vpop.xlane.xlu0 %210
      %212 = vmax.xlane.f32.xlu0 %v200
      %v213 = vpop.xlane.xlu0 %212
      %214 = vmax.xlane.f32.xlu0 %v201
      %v215 = vpop.xlane.xlu0 %214
      %216 = vmax.xlane.f32.xlu0 %v202
      %v217 = vpop.xlane.xlu0 %216
      %218 = vmax.xlane.f32.xlu0 %v203
      %v219 = vpop.xlane.xlu0 %218
      %v228 = vlaneseq
      %v229 = vand.u32 %v228, 127
      %v230 = vlaneseq
      %v231 = vshrl.u32 %v230, 7
      %v232 = vsub.s32 %v229, %v231
      %v233 = vrot.slane %v188, %v232
      %v234 = vadd.s32 %v229, 4294967288
      %v235 = vlaneseq
      %v236 = vshrl.u32 %v235, 7
      %v237 = vsub.s32 %v234, %v236
      %v238 = vrot.slane %v189, %v237
      %vm239 = vcmask 130112
      %v240 = vsel %vm239, %v238, %v233
      %v241 = vadd.s32 %v229, 4294967280
      %v242 = vlaneseq
      %v243 = vshrl.u32 %v242, 7
      %v244 = vsub.s32 %v241, %v243
      %v245 = vrot.slane %v190, %v244
      %vm246 = vcmask 195712
      %v247 = vsel %vm246, %v245, %v240
      %v248 = vadd.s32 %v229, 4294967272
      %v249 = vlaneseq
      %v250 = vshrl.u32 %v249, 7
      %v251 = vsub.s32 %v248, %v250
      %v252 = vrot.slane %v191, %v251
      %vm253 = vcmask 261312
      %v254 = vsel %vm253, %v252, %v247
      %v255 = vlaneseq
      %v256 = vshrl.u32 %v255, 7
      %v257 = vsub.s32 %v229, %v256
      %v258 = vrot.slane %v192, %v257
      %v259 = vlaneseq
      %v260 = vshrl.u32 %v259, 7
      %v261 = vsub.s32 %v234, %v260
      %v262 = vrot.slane %v193, %v261
      %v263 = vsel %vm239, %v262, %v258
      %v264 = vlaneseq
      %v265 = vshrl.u32 %v264, 7
      %v266 = vsub.s32 %v241, %v265
      %v267 = vrot.slane %v194, %v266
      %v268 = vsel %vm246, %v267, %v263
      %v269 = vlaneseq
      %v270 = vshrl.u32 %v269, 7
      %v271 = vsub.s32 %v248, %v270
      %v272 = vrot.slane %v195, %v271
      %v273 = vsel %vm253, %v272, %v268
      %vm274 = vcmask 1041409
      %v275 = vsel %vm274, %v273, %v254
      %v285 = vlaneseq
      %v286 = vshrl.u32 %v285, 7
      %v287 = vsub.s32 %v229, %v286
      %v288 = vrot.slane %v205, %v287
      %v289 = vlaneseq
      %v290 = vshrl.u32 %v289, 7
      %v291 = vsub.s32 %v234, %v290
      %v292 = vrot.slane %v207, %v291
      %v293 = vsel %vm239, %v292, %v288
      %v294 = vlaneseq
      %v295 = vshrl.u32 %v294, 7
      %v296 = vsub.s32 %v241, %v295
      %v297 = vrot.slane %v209, %v296
      %v298 = vsel %vm246, %v297, %v293
      %v299 = vlaneseq
      %v300 = vshrl.u32 %v299, 7
      %v301 = vsub.s32 %v248, %v300
      %v302 = vrot.slane %v211, %v301
      %v303 = vsel %vm253, %v302, %v298
      %v304 = vlaneseq
      %v305 = vshrl.u32 %v304, 7
      %v306 = vsub.s32 %v229, %v305
      %v307 = vrot.slane %v213, %v306
      %v308 = vlaneseq
      %v309 = vshrl.u32 %v308, 7
      %v310 = vsub.s32 %v234, %v309
      %v311 = vrot.slane %v215, %v310
      %v312 = vsel %vm239, %v311, %v307
      %v313 = vlaneseq
      %v314 = vshrl.u32 %v313, 7
      %v315 = vsub.s32 %v241, %v314
      %v316 = vrot.slane %v217, %v315
      %v317 = vsel %vm246, %v316, %v312
      %v318 = vlaneseq
      %v319 = vshrl.u32 %v318, 7
      %v320 = vsub.s32 %v248, %v319
      %v321 = vrot.slane %v219, %v320
      %v322 = vsel %vm253, %v321, %v317
      %vm323 = vcmask 1043459
      %v324 = vsel %vm323, %v322, %v303
      %vm326 = vcmask 1041408
      %v327 = vsel %vm326, %v275, %v324
      %v328 = vld [vmem:[%s1] sm:$0x3]
      %v329 = vld [vmem:[%s2] sm:$0xff]
      %v330 = vld [vmem:[%s2 + $0x8] sm:$0xff]
      %v331 = vld [vmem:[%s2 + $0x10] sm:$0xff]
      %v332 = vld [vmem:[%s2 + $0x18] sm:$0xff]
      %vm333 = vcmask 261120
      %v335 = vsel %vm333, %v327, 0
      %v338 = vsel %vm333, %v328, 0
      %340 = vmatprep.subr.mxu0 0.0
      %341 = vmatpush1.xpose.msra.mxu0 %v338
      %342 = vmatprep.subr.mxu0 0.0
      %343 = vmatpush1.xpose.msra.mxu0 0.0
      %344 = vmatprep.subr.mxu0 0.0
      %345 = vmatpush1.xpose.msra.mxu0 0.0
      %346 = vmatprep.subr.mxu0 0.0
      %347 = vmatpush1.xpose.msra.mxu0 0.0
      %348 = vmatprep.subr.mxu0 0.0
      %349 = vmatpush1.xpose.msra.mxu0 0.0
      %350 = vmatprep.subr.mxu0 0.0
      %351 = vmatpush1.xpose.msra.mxu0 0.0
      %352 = vmatprep.subr.mxu0 0.0
      %353 = vmatpush1.xpose.msra.mxu0 0.0
      %354 = vmatprep.subr.mxu0 0.0
      %355 = vmatpush1.xpose.msra.mxu0 0.0
      %356 = vmatprep.subr.mxu0 0.0
      %357 = vmatpush1.xpose.msra.mxu0 0.0
      %358 = vmatprep.subr.mxu0 0.0
      %359 = vmatpush1.xpose.msra.mxu0 0.0
      %360 = vmatprep.subr.mxu0 0.0
      %361 = vmatpush1.xpose.msra.mxu0 0.0
      %362 = vmatprep.subr.mxu0 0.0
      %363 = vmatpush1.xpose.msra.mxu0 0.0
      %364 = vmatprep.subr.mxu0 0.0
      %365 = vmatpush1.xpose.msra.mxu0 0.0
      %366 = vmatprep.subr.mxu0 0.0
      %367 = vmatpush1.xpose.msra.mxu0 0.0
      %368 = vmatprep.subr.mxu0 0.0
      %369 = vmatpush1.xpose.msra.mxu0 0.0
      %370 = vmatprep.subr.mxu0 0.0
      %371 = vmatpush1.xpose.msra.mxu0 0.0
      %372 = vmatprep.subr.mxu0 0.0
      %373 = vmatpush1.xpose.msra.mxu0 0.0
      %374 = vmatprep.subr.mxu0 0.0
      %375 = vmatpush1.xpose.msra.mxu0 0.0
      %376 = vmatprep.subr.mxu0 0.0
      %377 = vmatpush1.xpose.msra.mxu0 0.0
      %378 = vmatprep.subr.mxu0 0.0
      %379 = vmatpush1.xpose.msra.mxu0 0.0
      %380 = vmatprep.subr.mxu0 0.0
      %381 = vmatpush1.xpose.msra.mxu0 0.0
      %382 = vmatprep.subr.mxu0 0.0
      %383 = vmatpush1.xpose.msra.mxu0 0.0
      %384 = vmatprep.subr.mxu0 0.0
      %385 = vmatpush1.xpose.msra.mxu0 0.0
      %386 = vmatprep.subr.mxu0 0.0
      %387 = vmatpush1.xpose.msra.mxu0 0.0
      %388 = vmatprep.subr.mxu0 0.0
      %389 = vmatpush1.xpose.msra.mxu0 0.0
      %390 = vmatprep.subr.mxu0 0.0
      %391 = vmatpush1.xpose.msra.mxu0 0.0
      %392 = vmatprep.subr.mxu0 0.0
      %393 = vmatpush1.xpose.msra.mxu0 0.0
      %394 = vmatprep.subr.mxu0 0.0
      %395 = vmatpush1.xpose.msra.mxu0 0.0
      %396 = vmatprep.subr.mxu0 0.0
      %397 = vmatpush1.xpose.msra.mxu0 0.0
      %398 = vmatprep.subr.mxu0 0.0
      %399 = vmatpush1.xpose.msra.mxu0 0.0
      %400 = vmatprep.subr.mxu0 0.0
      %401 = vmatpush1.xpose.msra.mxu0 0.0
      %402 = vmatprep.subr.mxu0 0.0
      %403 = vmatpush1.xpose.msra.mxu0 0.0
      %404 = vmatprep.mubr.f32.mxu0 0.0
      %405 = vmatmul.mubr.f32.gmra.mrb[0].mxu0 %v335
      %v406 = vpop.f32.mrb[0].mxu0
      %v407 = vadd.f32 0.0, %v406
      %v408 = vpop.f32.mrb[0].mxu0
      %409 = vdwg.mxu0
      %v410 = vmax.f32 %v407, 0.0
      %v412 = vrot.slane %v410, 2
      %v414 = vadd.f32 %v410, %v412
      %vm415 = vcmask 15360
      %v417 = vsel %vm415, %v414, 0
      %v420 = vsel %vm415, %v329, 0
      %v423 = vsel %vm415, %v330, 0
      %v426 = vsel %vm415, %v331, 0
      %v429 = vsel %vm415, %v332, 0
      %431 = vmatprep.subr.mxu0 0.0
      %432 = vmatpush1.xpose.msra.mxu0 %v420
      %433 = vmatprep.subr.mxu0 0.0
      %434 = vmatpush1.xpose.msra.mxu0 %v423
      %435 = vmatprep.subr.mxu0 0.0
      %436 = vmatpush1.xpose.msra.mxu0 %v426
      %437 = vmatprep.subr.mxu0 0.0
      %438 = vmatpush1.xpose.msra.mxu0 %v429
      %439 = vmatprep.subr.mxu0 0.0
      %440 = vmatpush1.xpose.msra.mxu0 0.0
      %441 = vmatprep.subr.mxu0 0.0
      %442 = vmatpush1.xpose.msra.mxu0 0.0
      %443 = vmatprep.subr.mxu0 0.0
      %444 = vmatpush1.xpose.msra.mxu0 0.0
      %445 = vmatprep.subr.mxu0 0.0
      %446 = vmatpush1.xpose.msra.mxu0 0.0
      %447 = vmatprep.subr.mxu0 0.0
      %448 = vmatpush1.xpose.msra.mxu0 0.0
      %449 = vmatprep.subr.mxu0 0.0
      %450 = vmatpush1.xpose.msra.mxu0 0.0
      %451 = vmatprep.subr.mxu0 0.0
      %452 = vmatpush1.xpose.msra.mxu0 0.0
      %453 = vmatprep.subr.mxu0 0.0
      %454 = vmatpush1.xpose.msra.mxu0 0.0
      %455 = vmatprep.subr.mxu0 0.0
      %456 = vmatpush1.xpose.msra.mxu0 0.0
      %457 = vmatprep.subr.mxu0 0.0
      %458 = vmatpush1.xpose.msra.mxu0 0.0
      %459 = vmatprep.subr.mxu0 0.0
      %460 = vmatpush1.xpose.msra.mxu0 0.0
      %461 = vmatprep.subr.mxu0 0.0
      %462 = vmatpush1.xpose.msra.mxu0 0.0
      %463 = vmatprep.subr.mxu0 0.0
      %464 = vmatpush1.xpose.msra.mxu0 0.0
      %465 = vmatprep.subr.mxu0 0.0
      %466 = vmatpush1.xpose.msra.mxu0 0.0
      %467 = vmatprep.subr.mxu0 0.0
      %468 = vmatpush1.xpose.msra.mxu0 0.0
      %469 = vmatprep.subr.mxu0 0.0
      %470 = vmatpush1.xpose.msra.mxu0 0.0
      %471 = vmatprep.subr.mxu0 0.0
      %472 = vmatpush1.xpose.msra.mxu0 0.0
      %473 = vmatprep.subr.mxu0 0.0
      %474 = vmatpush1.xpose.msra.mxu0 0.0
      %475 = vmatprep.subr.mxu0 0.0
      %476 = vmatpush1.xpose.msra.mxu0 0.0
      %477 = vmatprep.subr.mxu0 0.0
      %478 = vmatpush1.xpose.msra.mxu0 0.0
      %479 = vmatprep.subr.mxu0 0.0
      %480 = vmatpush1.xpose.msra.mxu0 0.0
      %481 = vmatprep.subr.mxu0 0.0
      %482 = vmatpush1.xpose.msra.mxu0 0.0
      %483 = vmatprep.subr.mxu0 0.0
      %484 = vmatpush1.xpose.msra.mxu0 0.0
      %485 = vmatprep.subr.mxu0 0.0
      %486 = vmatpush1.xpose.msra.mxu0 0.0
      %487 = vmatprep.subr.mxu0 0.0
      %488 = vmatpush1.xpose.msra.mxu0 0.0
      %489 = vmatprep.subr.mxu0 0.0
      %490 = vmatpush1.xpose.msra.mxu0 0.0
      %491 = vmatprep.subr.mxu0 0.0
      %492 = vmatpush1.xpose.msra.mxu0 0.0
      %493 = vmatprep.subr.mxu0 0.0
      %494 = vmatpush1.xpose.msra.mxu0 0.0
      %495 = vmatprep.mubr.f32.mxu0 0.0
      %496 = vmatmul.mubr.f32.gmra.mrb[0].mxu0 %v417
      %v497 = vpop.f32.mrb[0].mxu0
      %v498 = vadd.f32 0.0, %v497
      %v499 = vpop.f32.mrb[0].mxu0
      %500 = vdwg.mxu0
      %v501 = vxor.u32 %v498, 2147483648
      %v502 = vmul.f32 %v501, 1.442695
      %v503 = vpow.pop %v502
      %v504 = vadd.f32 %v503, 1.0
      %v505 = vrcp.pop %v504
      %v506 = vmul.f32 1.0, %v505
      %vm507 = vcmask 254976
      %508 = vst.msk [vmem:[#allocation7] sm:$0x3] %vm507, %v506
    $region25: #{tpu_custom_call.1} parent=1 // pred_fallthru
      _
    // Predicated region
    $region26: #{tpu_custom_call.1} parent=1 // pred_check
      _
    $region27: #{tpu_custom_call.1} parent=1 // pred_check_branch
      %510 = sbr.rel (0) target = $region29
    $region28: #{tpu_custom_call.1} parent=1 // pred_region
      %s512 = ssub.s32 32, 32
      %513 = vsyncadd [#allocation6], %s512
      %s515 = sshll.u32 [#allocation7], 4
      %s516 = int_to_ptr.vmem [resolvable:$true] %s515
      %518 = dma.vmem_to_hbm [thread:$0]  %s516, 32, %s3, [#allocation6]
    $region29: #{tpu_custom_call.1} parent=1 // pred_fallthru
      _
    // Predicated region
    $region30: #{tpu_custom_call.1} parent=1 // pred_check
      _
    $region31: #{tpu_custom_call.1} parent=1 // pred_check_branch
      %520 = sbr.rel (0) target = $region33
    $region32: #{tpu_custom_call.1} parent=1 // pred_region
      %521 = dma.done [#allocation6], 32
    $region33: #{tpu_custom_call.1} parent=1 // pred_fallthru
      _
    %522 = vsyncpa [#allocation5], 1
    %523 = vsyncpa [#allocation6], 1

</llo_original>
